<compile_context>
chip_gen: v7x
topology: tpu7x:2x2x1
jax: 0.10.0
libtpu: 0.0.40
codegen_flags: <defaults>
</compile_context>

<pallas_src>
import math

import jax
import jax.numpy as jnp
import numpy as np
from jax import lax
from jax.experimental import pallas as pl
from jax.experimental.pallas import tpu as pltpu

_BN_EPS = 1e-3          # the module explicitly sets BatchNorm1d(eps=0.001)
_INV_SQRT2 = 0.7071067811865476


def _erf(z):
    # float32 erf via the Numerical Recipes erfc rational approximation
    # (|abs err| < 1.2e-7), built only from mul/add/exp/where so it lowers
    # cleanly in Mosaic (no reliance on an erf primitive lowering).
    a = jnp.abs(z)
    t = 1.0 / (1.0 + 0.5 * a)
    poly = -1.26551223 + t * (1.00002368 + t * (0.37409196 + t * (0.09678418 +
           t * (-0.18628806 + t * (0.27886807 + t * (-1.13520398 + t * (1.48851587 +
           t * (-0.82215223 + t * 0.17087277))))))))
    erfc_a = t * jnp.exp(-a * a + poly)
    erf_a = 1.0 - erfc_a
    return jnp.where(z >= 0.0, erf_a, -erf_a)


def _gelu_exact(x):
    # PyTorch nn.GELU() default is the exact erf form.
    return 0.5 * x * (1.0 + _erf(x * _INV_SQRT2))


def attention_pooling_kernel(x_ref, w_ref, scale_ref, shift_ref, o_ref):
    x = x_ref[...]                                   # (TB, S, D) in storage dtype
    tb, _, d = x.shape
    w = w_ref[...].astype(x.dtype)                   # (1, D), resident across grid

    # Conv1d(dim -> 1, k=1) == per-token dot product, routed to the MXU as a
    # batched (1, D) @ (D, S)^T contraction with f32 accumulation.  The Conv1d
    # bias is dropped: softmax is shift-invariant, so it cancels exactly.
    wq = jnp.broadcast_to(w[None, :, :], (tb, 1, d))                    # (TB, 1, D)
    logits = jnp.einsum("bqd,bkd->bqk", wq, x,
                        preferred_element_type=jnp.float32)             # (TB, 1, S) f32

    # Numerically-stable softmax over S (== dim=-1 of the PyTorch (B, 1, S) logits).
    m = jnp.max(logits, axis=-1, keepdims=True)                         # (TB, 1, 1)
    e = jnp.exp(logits - m)                                             # (TB, 1, S)
    ssum = jnp.sum(e, axis=-1, keepdims=True)                           # (TB, 1, 1)

    # y[b, d] = sum_s softmax(logits)[b, s] * x[b, s, d]  (batched MXU matmul) —
    # x is consumed in its storage dtype, accumulated in f32.
    y = jnp.einsum("bqk,bkd->bqd", e.astype(x.dtype), x,
                   preferred_element_type=jnp.float32)                  # (TB, 1, D) f32
    # Exact reciprocal: it acts on a tiny (TB, 1) tensor, so the cost is
    # negligible and the ~1e-3 approx-rcp error is avoided.
    y = y[:, 0, :] * pl.reciprocal(ssum[:, 0, :], approx=False)         # (TB, D)

    # GELU (exact erf form), then folded BatchNorm1d affine (eval mode, running
    # stats).  Dropout(p=0.1) is identity in inference.
    y = _gelu_exact(y)
    o_ref[...] = (y * scale_ref[...] + shift_ref[...]).astype(o_ref.dtype)


def _fold_batchnorm(gamma, beta, mean, var, eps=_BN_EPS):
    scale = gamma * lax.rsqrt(var + eps)
    shift = beta - mean * scale
    return scale, shift


def _vmem_capacity_bytes(default=64 << 20):
    # Per-generation VMEM capacity (128 MiB on v5e/v6e, 64 MiB per core on v7x).
    # Fall back to the smallest (v7x-safe) figure if the query is unavailable.
    try:
        cap = int(pltpu.get_tpu_info().vmem_capacity_bytes)
        if cap > 0:
            return cap
    except Exception:
        pass
    return default


def _choose_batch_tile(B, S, D, x_itemsize, vmem_budget_bytes, *, min_grid=2):
    # Dominant VMEM consumers per batch row: the double-buffered x tile plus the
    # double-buffered (tb, D) f32 output row; in-kernel temporaries are O(S + D)
    # f32 per row (no full f32 copy of the x tile is ever made).
    per_row = 2 * S * D * x_itemsize + 2 * 4 * D + 4 * (S + 2 * D) + 512
    tb = max(1, int(vmem_budget_bytes) // per_row)

    # Cap the tile so the "parallel" batch axis has >= min_grid steps whenever B
    # permits a sublane-aligned split: shards work across both v7x TensorCores
    # and gives the DMA pipeline something to overlap with on single-TC chips.
    if B >= 8 * min_grid:
        cap_tb = ((-(-B // min_grid) + 7) // 8) * 8
        tb = min(tb, cap_tb)

    if tb >= B:
        return B                      # whole batch fits in one block
    if tb >= 8:
        tb -= tb % 8                  # keep the (tb, D) output block sublane-aligned
    else:
        # TODO(synk): if even 8 rows of (S, D) exceed the VMEM budget (very long
        # sequences), switch to a flash-style streaming pass over S-tiles with
        # running max/sum accumulators instead of oversizing the batch block.
        tb = 8 if B > 8 else B
    return min(tb, B)


def attention_pooling(x, conv_w, conv_b, gamma, beta, running_mean, running_var,
                      *, vmem_budget_bytes=None, vmem_limit_bytes=None):
    """AttentionPooling forward (eval mode).

    x: (B, S, D); keep it bf16 in HBM for a ~2x bandwidth win — the kernel
    accumulates in f32 on the MXU.  conv_b is accepted for API parity with the
    PyTorch module but never enters the kernel: softmax is shift-invariant, so
    the Conv1d bias cancels exactly.  VMEM budget/limit default to cap/2 and
    3*cap/4 of the detected per-core VMEM (32/48 MiB on v7x, 64/96 MiB on
    v5e/v6e); override per deployment if needed.
    """
    assert x.ndim == 3
    del conv_b                        # dead math under softmax shift-invariance
    B, S, D = x.shape
    f32 = jnp.float32

    cap = _vmem_capacity_bytes()
    if vmem_budget_bytes is None:
        vmem_budget_bytes = cap // 2           # for the double-buffered x stream
    if vmem_limit_bytes is None:
        vmem_limit_bytes = (cap * 3) // 4      # headroom for params/temps/scratch

    scale, shift = _fold_batchnorm(gamma.astype(f32), beta.astype(f32),
                                   running_mean.astype(f32), running_var.astype(f32))
    w = conv_w.reshape(1, D).astype(x.dtype)   # tiny; stored in x's dtype
    scale = scale.reshape(1, D)
    shift = shift.reshape(1, D)

    tb = _choose_batch_tile(B, S, D, x.dtype.itemsize, vmem_budget_bytes)
    grid = (pl.cdiv(B, tb),)

    # Note: D should ideally be a multiple of 128 (it is for the module's default
    # dim=128) so the (TB, D) output and (1, D) params are lane-dense.
    return pl.pallas_call(
        attention_pooling_kernel,
        out_shape=jax.ShapeDtypeStruct((B, D), f32),
        grid=grid,
        in_specs=[
            pl.BlockSpec((tb, S, D), lambda i: (i, 0, 0)),   # x: streamed batch tiles
            pl.BlockSpec((1, D), lambda i: (0, 0)),          # conv weight (resident)
            pl.BlockSpec((1, D), lambda i: (0, 0)),          # folded BN scale
            pl.BlockSpec((1, D), lambda i: (0, 0)),          # folded BN shift
        ],
        out_specs=pl.BlockSpec((tb, D), lambda i: (i, 0)),
        compiler_params=pltpu.CompilerParams(
            dimension_semantics=("parallel",),   # shards batch tiles over v7x's 2 TCs
            vmem_limit_bytes=int(vmem_limit_bytes),
        ),
    )(x, w, scale, shift)


def reference(x, w, b, gamma, beta, mean, var):
    # Pure-JAX reference of the PyTorch forward (eval mode), f32 math.
    # The Conv1d bias is kept here to show it cancels under softmax.
    logits = jnp.einsum("bsd,d->bs", x, w) + b
    a = jax.nn.softmax(logits, axis=-1)
    y = jnp.einsum("bs,bsd->bd", a, x)
    y = jax.nn.gelu(y, approximate=False)
    return (y - mean) / jnp.sqrt(var + _BN_EPS) * gamma + beta


if __name__ == "__main__":
    B, S, D = 4, 16, 128   # module default dim=128 -> lane-dense D

    key = jax.random.PRNGKey(0)
    kx, kw, kb, kg, kbe, km, kv = jax.random.split(key, 7)

    bound = 1.0 / math.sqrt(D)
    x_f32 = jax.random.normal(kx, (B, S, D), dtype=jnp.float32)
    conv_w = jax.random.uniform(kw, (D,), minval=-bound, maxval=bound, dtype=jnp.float32)
    conv_b = jax.random.uniform(kb, (), minval=-bound, maxval=bound, dtype=jnp.float32)
    gamma = 1.0 + 0.1 * jax.random.normal(kg, (D,), dtype=jnp.float32)
    beta = 0.1 * jax.random.normal(kbe, (D,), dtype=jnp.float32)
    running_mean = 0.05 * jax.random.normal(km, (D,), dtype=jnp.float32)
    running_var = jax.random.uniform(kv, (D,), minval=0.5, maxval=1.5, dtype=jnp.float32)

    # Keep x in bf16 in HBM (halves traffic of the bandwidth-dominant operand).
    x_bf16 = x_f32.astype(jnp.bfloat16)

    out = attention_pooling(x_bf16, conv_w, conv_b, gamma, beta,
                            running_mean, running_var)
    out = jax.block_until_ready(out)

    # Reference mirrors the kernel's bf16 storage rounding of x / w; math in f32.
    x_in = x_bf16.astype(jnp.float32)
    w_in = conv_w.astype(jnp.bfloat16).astype(jnp.float32)
    ref = reference(x_in, w_in, conv_b, gamma, beta, running_mean, running_var)

    assert out.shape == (B, D)
    # Tolerance covers bf16 softmax-weight rounding.
    np.testing.assert_allclose(np.asarray(out), np.asarray(ref), rtol=2e-2, atol=2e-2)
    print("KERNEL_OK")
</pallas_src>

<mosaic_0001>
module attributes {stable_mosaic.version = 11 : i64} {
  func.func @attention_pooling_kernel(%arg0: i32, %arg1: memref<4x16x128xbf16, #tpu.memory_space<vmem>>, %arg2: memref<1x128xbf16, #tpu.memory_space<vmem>>, %arg3: memref<1x128xf32, #tpu.memory_space<vmem>>, %arg4: memref<1x128xf32, #tpu.memory_space<vmem>>, %arg5: memref<4x128xf32, #tpu.memory_space<vmem>>) attributes {dimension_semantics = [#tpu.dimension_semantics<parallel>], iteration_bounds = array<i64: 1>, scalar_prefetch = 0 : i64, scratch_operands = 0 : i64, tpu.core_type = #tpu.core_type<tc>, window_params = [{transform_indices = @transform_0, window_bounds = array<i64: 4, 16, 128>}, {pipeline_mode = #tpu.pipeline_mode<synchronous>, transform_indices = @transform_1, window_bounds = array<i64: 1, 128>}, {pipeline_mode = #tpu.pipeline_mode<synchronous>, transform_indices = @transform_2, window_bounds = array<i64: 1, 128>}, {pipeline_mode = #tpu.pipeline_mode<synchronous>, transform_indices = @transform_3, window_bounds = array<i64: 1, 128>}, {transform_indices = @transform_4, window_bounds = array<i64: 4, 128>}]} {
    %c0 = arith.constant 0 : index
    %c0_0 = arith.constant 0 : index
    %c0_1 = arith.constant 0 : index
    %0 = vector.load %arg1[%c0, %c0_0, %c0_1] : memref<4x16x128xbf16, #tpu.memory_space<vmem>>, vector<4x16x128xbf16>
    %c0_2 = arith.constant 0 : index
    %c0_3 = arith.constant 0 : index
    %1 = vector.load %arg2[%c0_2, %c0_3] : memref<1x128xbf16, #tpu.memory_space<vmem>>, vector<1x128xbf16>
    %2 = vector.shape_cast %1 : vector<1x128xbf16> to vector<1x1x128xbf16>
    %3 = vector.shape_cast %2 : vector<1x1x128xbf16> to vector<1x1x128xbf16>
    %4 = vector.broadcast %3 : vector<1x1x128xbf16> to vector<4x1x128xbf16>
    "tpu.trace_start"() <{level = 10 : i32, message = "bqd,bkd->bqk"}> : () -> ()
    %cst = arith.constant dense<0.000000e+00> : vector<4x1x16xf32>
    %5 = tpu.matmul %4, %0, %cst {dimension_numbers = #tpu.dot_dimension_numbers<[2], [2], [1], [1], [0, 0, 0, 1, 1, 1], [0], [0]>} : vector<4x1x128xbf16>, vector<4x16x128xbf16>, vector<4x1x16xf32> -> vector<4x1x16xf32>
    "tpu.trace_stop"() : () -> ()
    %cst_4 = arith.constant dense<0xFF800000> : vector<4x1xf32>
    %6 = vector.multi_reduction <maximumf>, %5, %cst_4 [2] : vector<4x1x16xf32> to vector<4x1xf32>
    %7 = vector.shape_cast %6 : vector<4x1xf32> to vector<4x1x1xf32>
    %8 = vector.broadcast %7 : vector<4x1x1xf32> to vector<4x1x16xf32>
    %9 = arith.subf %5, %8 : vector<4x1x16xf32>
    %10 = math.exp %9 : vector<4x1x16xf32>
    %cst_5 = arith.constant dense<0.000000e+00> : vector<4x1xf32>
    %11 = vector.multi_reduction <add>, %10, %cst_5 [2] : vector<4x1x16xf32> to vector<4x1xf32>
    %12 = vector.shape_cast %11 : vector<4x1xf32> to vector<4x1x1xf32>
    %13 = arith.truncf %10 : vector<4x1x16xf32> to vector<4x1x16xbf16>
    "tpu.trace_start"() <{level = 10 : i32, message = "bqk,bkd->bqd"}> : () -> ()
    %cst_6 = arith.constant dense<0.000000e+00> : vector<4x1x128xf32>
    %14 = tpu.matmul %13, %0, %cst_6 {dimension_numbers = #tpu.dot_dimension_numbers<[2], [1], [1], [2], [0, 0, 0, 1, 1, 2], [0], [0]>} : vector<4x1x16xbf16>, vector<4x16x128xbf16>, vector<4x1x128xf32> -> vector<4x1x128xf32>
    "tpu.trace_stop"() : () -> ()
    %15 = vector.shape_cast %14 : vector<4x1x128xf32> to vector<4x128xf32>
    %16 = vector.shape_cast %12 : vector<4x1x1xf32> to vector<4x1xf32>
    %17 = tpu.reciprocal %16 : vector<4x1xf32> -> vector<4x1xf32>
    %18 = vector.broadcast %17 : vector<4x1xf32> to vector<4x128xf32>
    %19 = arith.mulf %15, %18 : vector<4x128xf32>
    %cst_7 = arith.constant 5.000000e-01 : f32
    %20 = vector.broadcast %cst_7 : f32 to vector<4x128xf32>
    %21 = arith.mulf %20, %19 : vector<4x128xf32>
    %cst_8 = arith.constant 0.707106769 : f32
    %22 = vector.broadcast %cst_8 : f32 to vector<4x128xf32>
    %23 = arith.mulf %19, %22 : vector<4x128xf32>
    %24 = math.absf %23 : vector<4x128xf32>
    %cst_9 = arith.constant 5.000000e-01 : f32
    %25 = vector.broadcast %cst_9 : f32 to vector<4x128xf32>
    %26 = arith.mulf %25, %24 : vector<4x128xf32>
    %cst_10 = arith.constant 1.000000e+00 : f32
    %27 = vector.broadcast %cst_10 : f32 to vector<4x128xf32>
    %28 = arith.addf %27, %26 : vector<4x128xf32>
    %cst_11 = arith.constant 1.000000e+00 : f32
    %29 = vector.broadcast %cst_11 : f32 to vector<4x128xf32>
    %30 = arith.divf %29, %28 : vector<4x128xf32>
    %cst_12 = arith.constant 0.170872763 : f32
    %31 = vector.broadcast %cst_12 : f32 to vector<4x128xf32>
    %32 = arith.mulf %30, %31 : vector<4x128xf32>
    %cst_13 = arith.constant -0.822152256 : f32
    %33 = vector.broadcast %cst_13 : f32 to vector<4x128xf32>
    %34 = arith.addf %33, %32 : vector<4x128xf32>
    %35 = arith.mulf %30, %34 : vector<4x128xf32>
    %cst_14 = arith.constant 1.48851585 : f32
    %36 = vector.broadcast %cst_14 : f32 to vector<4x128xf32>
    %37 = arith.addf %36, %35 : vector<4x128xf32>
    %38 = arith.mulf %30, %37 : vector<4x128xf32>
    %cst_15 = arith.constant -1.13520396 : f32
    %39 = vector.broadcast %cst_15 : f32 to vector<4x128xf32>
    %40 = arith.addf %39, %38 : vector<4x128xf32>
    %41 = arith.mulf %30, %40 : vector<4x128xf32>
    %cst_16 = arith.constant 0.278868079 : f32
    %42 = vector.broadcast %cst_16 : f32 to vector<4x128xf32>
    %43 = arith.addf %42, %41 : vector<4x128xf32>
    %44 = arith.mulf %30, %43 : vector<4x128xf32>
    %cst_17 = arith.constant -0.186288059 : f32
    %45 = vector.broadcast %cst_17 : f32 to vector<4x128xf32>
    %46 = arith.addf %45, %44 : vector<4x128xf32>
    %47 = arith.mulf %30, %46 : vector<4x128xf32>
    %cst_18 = arith.constant 0.0967841818 : f32
    %48 = vector.broadcast %cst_18 : f32 to vector<4x128xf32>
    %49 = arith.addf %48, %47 : vector<4x128xf32>
    %50 = arith.mulf %30, %49 : vector<4x128xf32>
    %cst_19 = arith.constant 0.374091953 : f32
    %51 = vector.broadcast %cst_19 : f32 to vector<4x128xf32>
    %52 = arith.addf %51, %50 : vector<4x128xf32>
    %53 = arith.mulf %30, %52 : vector<4x128xf32>
    %cst_20 = arith.constant 1.00002372 : f32
    %54 = vector.broadcast %cst_20 : f32 to vector<4x128xf32>
    %55 = arith.addf %54, %53 : vector<4x128xf32>
    %56 = arith.mulf %30, %55 : vector<4x128xf32>
    %cst_21 = arith.constant -1.26551223 : f32
    %57 = vector.broadcast %cst_21 : f32 to vector<4x128xf32>
    %58 = arith.addf %57, %56 : vector<4x128xf32>
    %cst_22 = arith.constant 0.000000e+00 : f32
    %59 = vector.broadcast %cst_22 : f32 to vector<4x128xf32>
    %60 = arith.subf %59, %24 : vector<4x128xf32>
    %61 = arith.mulf %60, %24 : vector<4x128xf32>
    %62 = arith.addf %61, %58 : vector<4x128xf32>
    %63 = math.exp %62 : vector<4x128xf32>
    %64 = arith.mulf %30, %63 : vector<4x128xf32>
    %cst_23 = arith.constant 1.000000e+00 : f32
    %65 = vector.broadcast %cst_23 : f32 to vector<4x128xf32>
    %66 = arith.subf %65, %64 : vector<4x128xf32>
    %cst_24 = arith.constant 0.000000e+00 : f32
    %67 = vector.broadcast %cst_24 : f32 to vector<4x128xf32>
    %68 = arith.cmpf oge, %23, %67 : vector<4x128xf32>
    %cst_25 = arith.constant 0.000000e+00 : f32
    %69 = vector.broadcast %cst_25 : f32 to vector<4x128xf32>
    %70 = arith.subf %69, %66 : vector<4x128xf32>
    %71 = arith.select %68, %66, %70 : vector<4x128xi1>, vector<4x128xf32>
    %cst_26 = arith.constant 1.000000e+00 : f32
    %72 = vector.broadcast %cst_26 : f32 to vector<4x128xf32>
    %73 = arith.addf %72, %71 : vector<4x128xf32>
    %74 = arith.mulf %21, %73 : vector<4x128xf32>
    %c0_27 = arith.constant 0 : index
    %c0_28 = arith.constant 0 : index
    %75 = vector.load %arg3[%c0_27, %c0_28] : memref<1x128xf32, #tpu.memory_space<vmem>>, vector<1x128xf32>
    %76 = vector.broadcast %75 : vector<1x128xf32> to vector<4x128xf32>
    %77 = arith.mulf %74, %76 : vector<4x128xf32>
    %c0_29 = arith.constant 0 : index
    %c0_30 = arith.constant 0 : index
    %78 = vector.load %arg4[%c0_29, %c0_30] : memref<1x128xf32, #tpu.memory_space<vmem>>, vector<1x128xf32>
    %79 = vector.broadcast %78 : vector<1x128xf32> to vector<4x128xf32>
    %80 = arith.addf %77, %79 : vector<4x128xf32>
    %c0_31 = arith.constant 0 : index
    %c0_32 = arith.constant 0 : index
    %81 = vector.load %arg5[%c0_31, %c0_32] : memref<4x128xf32, #tpu.memory_space<vmem>>, vector<4x128xf32>
    tpu.vector_store %arg5[%c0_31, %c0_32], %80 {strides = array<i32>} : memref<4x128xf32, #tpu.memory_space<vmem>>, vector<4x128xf32>,
    return
  }
  func.func @transform_0(%arg0: i32) -> (i32, i32, i32) {
    %c0_i32 = arith.constant 0 : i32
    %c0_i32_0 = arith.constant 0 : i32
    %c0_i32_1 = arith.constant 0 : i32
    return %arg0, %c0_i32, %c0_i32_0 : i32, i32, i32
  }
  func.func @transform_1(%arg0: i32) -> (i32, i32) {
    %c0_i32 = arith.constant 0 : i32
    %c0_i32_0 = arith.constant 0 : i32
    %c0_i32_1 = arith.constant 0 : i32
    return %c0_i32, %c0_i32_0 : i32, i32
  }
  func.func @transform_2(%arg0: i32) -> (i32, i32) {
    %c0_i32 = arith.constant 0 : i32
    %c0_i32_0 = arith.constant 0 : i32
    %c0_i32_1 = arith.constant 0 : i32
    return %c0_i32, %c0_i32_0 : i32, i32
  }
  func.func @transform_3(%arg0: i32) -> (i32, i32) {
    %c0_i32 = arith.constant 0 : i32
    %c0_i32_0 = arith.constant 0 : i32
    %c0_i32_1 = arith.constant 0 : i32
    return %c0_i32, %c0_i32_0 : i32, i32
  }
  func.func @transform_4(%arg0: i32) -> (i32, i32) {
    %c0_i32 = arith.constant 0 : i32
    %c0_i32_0 = arith.constant 0 : i32
    return %arg0, %c0_i32 : i32, i32
  }
}

</mosaic_0001>

<llo_original>
// kernel: tpu_custom_call.1
$region0: #{tpu_custom_call.1}
  #allocation0 [shape = 'u32[]', space=smem, size = 0x4, offset = 0x4, fixed_abs, tag = 'smem constant byte address 0x4 - core index']
  #allocation1 [shape = 'u32[144,128]{1,0:T(1,128)}', space=vmem, size = 0x12000, scoped, tag = 'internal scratch']
  %s0 = inlined_call_operand.hbm [shape: bf16[4,16,128], index: 0, kind: input, shape index: {}]
  %s1 = inlined_call_operand.vmem [shape: bf16[1,128], index: 1, kind: input, shape index: {}]
  %s2 = inlined_call_operand.vmem [shape: f32[1,128], index: 2, kind: input, shape index: {}]
  %s3 = inlined_call_operand.vmem [shape: f32[1,128], index: 3, kind: input, shape index: {}]
  %s4 = inlined_call_operand.hbm [shape: f32[4,128], index: 4, kind: output, shape index: {}]
  %s5 = sld [smem:[#allocation0]]
  $region30: #{tpu_custom_call.1} parent=0
    _
  %s7 = ssub.s32 1, %s5
  %s8 = scalar_select 0, %s7, %s5
  $region1: #{tpu_custom_call.1} parent=0
    #allocation2 [shape = 'u8[16384]{0}', space=vmem, size = 0x4000, scoped, tag = 'input window, operand 0, single buffered']
    #allocation3 [shape = 's32[1]{0}', space=sflag, size = 0x4, scoped, tag = 'scoped memory for tpu_custom_call.1']
    #allocation4 [shape = 's32[1]{0}', space=sflag, size = 0x4, scoped, tag = 'scoped memory for tpu_custom_call.1']
    #allocation5 [shape = 'u8[2048]{0}', space=vmem, size = 0x800, scoped, tag = 'output window, operand 0, single buffered']
    %9 = vsyncpa [#allocation3], 0
    %10 = vsyncpa [#allocation4], 0
    // Predicated region
    $region2: #{tpu_custom_call.1} parent=1 // pred_check
      _
    $region3: #{tpu_custom_call.1} parent=1 // pred_check_branch
      %12 = sbr.rel (0) target = $region5
    $region4: #{tpu_custom_call.1} parent=1 // pred_region
      %s14 = ssub.s32 512, 512
      %15 = vsyncadd [#allocation3], %s14
      %s16 = sshll.u32 [#allocation2], 4
      %s17 = int_to_ptr.vmem [resolvable:$true] %s16
      %22 = dma.hbm_to_vmem [thread:$0]  %s0, 512, %s17, [#allocation3], 64, 64, 4
    $region5: #{tpu_custom_call.1} parent=1 // pred_fallthru
      _
    // Predicated region
    $region6: #{tpu_custom_call.1} parent=1 // pred_check
      _
    $region7: #{tpu_custom_call.1} parent=1 // pred_check_branch
      %24 = sbr.rel (0) target = $region9
    $region8: #{tpu_custom_call.1} parent=1 // pred_region
      _
    $region9: #{tpu_custom_call.1} parent=1 // pred_fallthru
      _
    // Predicated region
    $region10: #{tpu_custom_call.1} parent=1 // pred_check
      _
    $region11: #{tpu_custom_call.1} parent=1 // pred_check_branch
      %26 = sbr.rel (0) target = $region13
    $region12: #{tpu_custom_call.1} parent=1 // pred_region
      _
    $region13: #{tpu_custom_call.1} parent=1 // pred_fallthru
      _
    // Predicated region
    $region14: #{tpu_custom_call.1} parent=1 // pred_check
      _
    $region15: #{tpu_custom_call.1} parent=1 // pred_check_branch
      %28 = sbr.rel (0) target = $region17
    $region16: #{tpu_custom_call.1} parent=1 // pred_region
      _
    $region17: #{tpu_custom_call.1} parent=1 // pred_fallthru
      _
    // Predicated region
    $region18: #{tpu_custom_call.1} parent=1 // pred_check
      _
    $region19: #{tpu_custom_call.1} parent=1 // pred_check_branch
      %30 = sbr.rel (0) target = $region21
    $region20: #{tpu_custom_call.1} parent=1 // pred_region
      %31 = dma.done [#allocation3], 512
    $region21: #{tpu_custom_call.1} parent=1 // pred_fallthru
      _
    %v33 = vld [vmem:[#allocation2] sm:$0xf]
    %v34 = vld [vmem:[#allocation2 + $0x4] sm:$0xf]
    %v35 = vld [vmem:[#allocation2 + $0x8] sm:$0xf]
    %v36 = vld [vmem:[#allocation2 + $0xc] sm:$0xf]
    %v37 = vld [vmem:[#allocation2 + $0x10] sm:$0xf]
    %v38 = vld [vmem:[#allocation2 + $0x14] sm:$0xf]
    %v39 = vld [vmem:[#allocation2 + $0x18] sm:$0xf]
    %v40 = vld [vmem:[#allocation2 + $0x1c] sm:$0xf]
    %v41 = vld [vmem:[%s1] sm:$0x1]
    %v44 = vunpack.c.l.b16 %v33
    %v45 = vunpack.c.l.b16 %v34
    %v46 = vpack.c.b16 %v45, %v44
    %48 = vmatprep.subr.bf16.mxu0 0
    %49 = vmatpush1.bf16.xpose.msra.mxu0 %v46
    %50 = vmatprep.subr.bf16.mxu0 0
    %51 = vmatpush1.bf16.xpose.msra.mxu0 0
    %52 = vmatprep.subr.bf16.mxu0 0
    %53 = vmatpush1.bf16.xpose.msra.mxu0 0
    %54 = vmatprep.subr.bf16.mxu0 0
    %55 = vmatpush1.bf16.xpose.msra.mxu0 0
    %56 = vmatprep.subr.bf16.mxu0 0
    %57 = vmatpush1.bf16.xpose.msra.mxu0 0
    %58 = vmatprep.subr.bf16.mxu0 0
    %59 = vmatpush1.bf16.xpose.msra.mxu0 0
    %60 = vmatprep.subr.bf16.mxu0 0
    %61 = vmatpush1.bf16.xpose.msra.mxu0 0
    %62 = vmatprep.subr.bf16.mxu0 0
    %63 = vmatpush1.bf16.xpose.msra.mxu0 0
    %64 = vmatprep.subr.bf16.mxu0 0
    %65 = vmatpush1.bf16.xpose.msra.mxu0 0
    %66 = vmatprep.subr.bf16.mxu0 0
    %67 = vmatpush1.bf16.xpose.msra.mxu0 0
    %68 = vmatprep.subr.bf16.mxu0 0
    %69 = vmatpush1.bf16.xpose.msra.mxu0 0
    %70 = vmatprep.subr.bf16.mxu0 0
    %71 = vmatpush1.bf16.xpose.msra.mxu0 0
    %72 = vmatprep.subr.bf16.mxu0 0
    %73 = vmatpush1.bf16.xpose.msra.mxu0 0
    %74 = vmatprep.subr.bf16.mxu0 0
    %75 = vmatpush1.bf16.xpose.msra.mxu0 0
    %76 = vmatprep.subr.bf16.mxu0 0
    %77 = vmatpush1.bf16.xpose.msra.mxu0 0
    %78 = vmatprep.subr.bf16.mxu0 0
    %79 = vmatpush1.bf16.xpose.msra.mxu0 0
    %80 = vmatprep.mubr.bf16.mxu0 0
    %81 = vmatmul.mubr.bf16.gmra.mrb[0].mxu0 %v41
    %v82 = vpop.f32.mrb[0].mxu0
    %v83 = vadd.f32 0.0, %v82
    %v84 = vpop.f32.mrb[0].mxu0
    %v85 = vpop.f32.mrb[0].mxu0
    %v86 = vpop.f32.mrb[0].mxu0
    %87 = vdwg.mxu0
    %v90 = vunpack.c.l.b16 %v35
    %v91 = vunpack.c.l.b16 %v36
    %v92 = vpack.c.b16 %v91, %v90
    %94 = vmatprep.subr.bf16.mxu0 0
    %95 = vmatpush1.bf16.xpose.msra.mxu0 %v92
    %96 = vmatprep.subr.bf16.mxu0 0
    %97 = vmatpush1.bf16.xpose.msra.mxu0 0
    %98 = vmatprep.subr.bf16.mxu0 0
    %99 = vmatpush1.bf16.xpose.msra.mxu0 0
    %100 = vmatprep.subr.bf16.mxu0 0
    %101 = vmatpush1.bf16.xpose.msra.mxu0 0
    %102 = vmatprep.subr.bf16.mxu0 0
    %103 = vmatpush1.bf16.xpose.msra.mxu0 0
    %104 = vmatprep.subr.bf16.mxu0 0
    %105 = vmatpush1.bf16.xpose.msra.mxu0 0
    %106 = vmatprep.subr.bf16.mxu0 0
    %107 = vmatpush1.bf16.xpose.msra.mxu0 0
    %108 = vmatprep.subr.bf16.mxu0 0
    %109 = vmatpush1.bf16.xpose.msra.mxu0 0
    %110 = vmatprep.subr.bf16.mxu0 0
    %111 = vmatpush1.bf16.xpose.msra.mxu0 0
    %112 = vmatprep.subr.bf16.mxu0 0
    %113 = vmatpush1.bf16.xpose.msra.mxu0 0
    %114 = vmatprep.subr.bf16.mxu0 0
    %115 = vmatpush1.bf16.xpose.msra.mxu0 0
    %116 = vmatprep.subr.bf16.mxu0 0
    %117 = vmatpush1.bf16.xpose.msra.mxu0 0
    %118 = vmatprep.subr.bf16.mxu0 0
    %119 = vmatpush1.bf16.xpose.msra.mxu0 0
    %120 = vmatprep.subr.bf16.mxu0 0
    %121 = vmatpush1.bf16.xpose.msra.mxu0 0
    %122 = vmatprep.subr.bf16.mxu0 0
    %123 = vmatpush1.bf16.xpose.msra.mxu0 0
    %124 = vmatprep.subr.bf16.mxu0 0
    %125 = vmatpush1.bf16.xpose.msra.mxu0 0
    %126 = vmatprep.mubr.bf16.mxu0 0
    %127 = vmatmul.mubr.bf16.gmra.mrb[0].mxu0 %v41
    %v128 = vpop.f32.mrb[0].mxu0
    %v129 = vadd.f32 0.0, %v128
    %v130 = vpop.f32.mrb[0].mxu0
    %v131 = vpop.f32.mrb[0].mxu0
    %v132 = vpop.f32.mrb[0].mxu0
    %133 = vdwg.mxu0
    %v136 = vunpack.c.l.b16 %v37
    %v137 = vunpack.c.l.b16 %v38
    %v138 = vpack.c.b16 %v137, %v136
    %140 = vmatprep.subr.bf16.mxu0 0
    %141 = vmatpush1.bf16.xpose.msra.mxu0 %v138
    %142 = vmatprep.subr.bf16.mxu0 0
    %143 = vmatpush1.bf16.xpose.msra.mxu0 0
    %144 = vmatprep.subr.bf16.mxu0 0
    %145 = vmatpush1.bf16.xpose.msra.mxu0 0
    %146 = vmatprep.subr.bf16.mxu0 0
    %147 = vmatpush1.bf16.xpose.msra.mxu0 0
    %148 = vmatprep.subr.bf16.mxu0 0
    %149 = vmatpush1.bf16.xpose.msra.mxu0 0
    %150 = vmatprep.subr.bf16.mxu0 0
    %151 = vmatpush1.bf16.xpose.msra.mxu0 0
    %152 = vmatprep.subr.bf16.mxu0 0
    %153 = vmatpush1.bf16.xpose.msra.mxu0 0
    %154 = vmatprep.subr.bf16.mxu0 0
    %155 = vmatpush1.bf16.xpose.msra.mxu0 0
    %156 = vmatprep.subr.bf16.mxu0 0
    %157 = vmatpush1.bf16.xpose.msra.mxu0 0
    %158 = vmatprep.subr.bf16.mxu0 0
    %159 = vmatpush1.bf16.xpose.msra.mxu0 0
    %160 = vmatprep.subr.bf16.mxu0 0
    %161 = vmatpush1.bf16.xpose.msra.mxu0 0
    %162 = vmatprep.subr.bf16.mxu0 0
    %163 = vmatpush1.bf16.xpose.msra.mxu0 0
    %164 = vmatprep.subr.bf16.mxu0 0
    %165 = vmatpush1.bf16.xpose.msra.mxu0 0
    %166 = vmatprep.subr.bf16.mxu0 0
    %167 = vmatpush1.bf16.xpose.msra.mxu0 0
    %168 = vmatprep.subr.bf16.mxu0 0
    %169 = vmatpush1.bf16.xpose.msra.mxu0 0
    %170 = vmatprep.subr.bf16.mxu0 0
    %171 = vmatpush1.bf16.xpose.msra.mxu0 0
    %172 = vmatprep.mubr.bf16.mxu0 0
    %173 = vmatmul.mubr.bf16.gmra.mrb[0].mxu0 %v41
    %v174 = vpop.f32.mrb[0].mxu0
    %v175 = vadd.f32 0.0, %v174
    %v176 = vpop.f32.mrb[0].mxu0
    %v177 = vpop.f32.mrb[0].mxu0
    %v178 = vpop.f32.mrb[0].mxu0
    %179 = vdwg.mxu0
    %v182 = vunpack.c.l.b16 %v39
    %v183 = vunpack.c.l.b16 %v40
    %v184 = vpack.c.b16 %v183, %v182
    %186 = vmatprep.subr.bf16.mxu0 0
    %187 = vmatpush1.bf16.xpose.msra.mxu0 %v184
    %188 = vmatprep.subr.bf16.mxu0 0
    %189 = vmatpush1.bf16.xpose.msra.mxu0 0
    %190 = vmatprep.subr.bf16.mxu0 0
    %191 = vmatpush1.bf16.xpose.msra.mxu0 0
    %192 = vmatprep.subr.bf16.mxu0 0
    %193 = vmatpush1.bf16.xpose.msra.mxu0 0
    %194 = vmatprep.subr.bf16.mxu0 0
    %195 = vmatpush1.bf16.xpose.msra.mxu0 0
    %196 = vmatprep.subr.bf16.mxu0 0
    %197 = vmatpush1.bf16.xpose.msra.mxu0 0
    %198 = vmatprep.subr.bf16.mxu0 0
    %199 = vmatpush1.bf16.xpose.msra.mxu0 0
    %200 = vmatprep.subr.bf16.mxu0 0
    %201 = vmatpush1.bf16.xpose.msra.mxu0 0
    %202 = vmatprep.subr.bf16.mxu0 0
    %203 = vmatpush1.bf16.xpose.msra.mxu0 0
    %204 = vmatprep.subr.bf16.mxu0 0
    %205 = vmatpush1.bf16.xpose.msra.mxu0 0
    %206 = vmatprep.subr.bf16.mxu0 0
    %207 = vmatpush1.bf16.xpose.msra.mxu0 0
    %208 = vmatprep.subr.bf16.mxu0 0
    %209 = vmatpush1.bf16.xpose.msra.mxu0 0
    %210 = vmatprep.subr.bf16.mxu0 0
    %211 = vmatpush1.bf16.xpose.msra.mxu0 0
    %212 = vmatprep.subr.bf16.mxu0 0
    %213 = vmatpush1.bf16.xpose.msra.mxu0 0
    %214 = vmatprep.subr.bf16.mxu0 0
    %215 = vmatpush1.bf16.xpose.msra.mxu0 0
    %216 = vmatprep.subr.bf16.mxu0 0
    %217 = vmatpush1.bf16.xpose.msra.mxu0 0
    %218 = vmatprep.mubr.bf16.mxu0 0
    %219 = vmatmul.mubr.bf16.gmra.mrb[0].mxu0 %v41
    %v220 = vpop.f32.mrb[0].mxu0
    %v221 = vadd.f32 0.0, %v220
    %v222 = vpop.f32.mrb[0].mxu0
    %v223 = vpop.f32.mrb[0].mxu0
    %v224 = vpop.f32.mrb[0].mxu0
    %225 = vdwg.mxu0
    %vm226 = vcmask 122880
    %v227 = vsel %vm226, %v83, -inf
    %228 = vmax.xlane.f32.xlu0 %v227
    %v229 = vpop.xlane.xlu0 %228
    %v230 = vsel %vm226, %v129, -inf
    %231 = vmax.xlane.f32.xlu0 %v230
    %v232 = vpop.xlane.xlu0 %231
    %v233 = vsel %vm226, %v175, -inf
    %234 = vmax.xlane.f32.xlu0 %v233
    %v235 = vpop.xlane.xlu0 %234
    %v236 = vsel %vm226, %v221, -inf
    %237 = vmax.xlane.f32.xlu0 %v236
    %v238 = vpop.xlane.xlu0 %237
    %v239 = vsub.f32 %v83, %v229
    %v240 = vsub.f32 %v129, %v232
    %v241 = vsub.f32 %v175, %v235
    %v242 = vsub.f32 %v221, %v238
    %v243 = vmul.f32 %v239, 1.442695
    %v244 = vpow.pop %v243
    %v245 = vmul.f32 %v240, 1.442695
    %v246 = vpow.pop %v245
    %v247 = vmul.f32 %v241, 1.442695
    %v248 = vpow.pop %v247
    %v249 = vmul.f32 %v242, 1.442695
    %v250 = vpow.pop %v249
    %v251 = vsel %vm226, %v244, 0.0
    %252 = vadd.xlane.f32.xlu0 %v251
    %v253 = vpop.xlane.xlu0 %252
    %v254 = vsel %vm226, %v246, 0.0
    %255 = vadd.xlane.f32.xlu0 %v254
    %v256 = vpop.xlane.xlu0 %255
    %v257 = vsel %vm226, %v248, 0.0
    %258 = vadd.xlane.f32.xlu0 %v257
    %v259 = vpop.xlane.xlu0 %258
    %v260 = vsel %vm226, %v250, 0.0
    %261 = vadd.xlane.f32.xlu0 %v260
    %v262 = vpop.xlane.xlu0 %261
    %v263 = vpack.c.bf16 %v244, %v244
    %v264 = vpack.c.bf16 %v246, %v246
    %v265 = vpack.c.bf16 %v248, %v248
    %v266 = vpack.c.bf16 %v250, %v250
    %vm267 = vcmask 130048
    %v269 = vsel %vm267, %v263, 0
    %271 = vmatprep.subr.bf16.mxu0 0
    %272 = vmatpush1.bf16.msra.mxu0 %v46
    %273 = vmatprep.subr.bf16.mxu0 0
    %274 = vmatpush1.bf16.msra.mxu0 0
    %275 = vmatprep.subr.bf16.mxu0 0
    %276 = vmatpush1.bf16.msra.mxu0 0
    %277 = vmatprep.subr.bf16.mxu0 0
    %278 = vmatpush1.bf16.msra.mxu0 0
    %279 = vmatprep.subr.bf16.mxu0 0
    %280 = vmatpush1.bf16.msra.mxu0 0
    %281 = vmatprep.subr.bf16.mxu0 0
    %282 = vmatpush1.bf16.msra.mxu0 0
    %283 = vmatprep.subr.bf16.mxu0 0
    %284 = vmatpush1.bf16.msra.mxu0 0
    %285 = vmatprep.subr.bf16.mxu0 0
    %286 = vmatpush1.bf16.msra.mxu0 0
    %287 = vmatprep.subr.bf16.mxu0 0
    %288 = vmatpush1.bf16.msra.mxu0 0
    %289 = vmatprep.subr.bf16.mxu0 0
    %290 = vmatpush1.bf16.msra.mxu0 0
    %291 = vmatprep.subr.bf16.mxu0 0
    %292 = vmatpush1.bf16.msra.mxu0 0
    %293 = vmatprep.subr.bf16.mxu0 0
    %294 = vmatpush1.bf16.msra.mxu0 0
    %295 = vmatprep.subr.bf16.mxu0 0
    %296 = vmatpush1.bf16.msra.mxu0 0
    %297 = vmatprep.subr.bf16.mxu0 0
    %298 = vmatpush1.bf16.msra.mxu0 0
    %299 = vmatprep.subr.bf16.mxu0 0
    %300 = vmatpush1.bf16.msra.mxu0 0
    %301 = vmatprep.subr.bf16.mxu0 0
    %302 = vmatpush1.bf16.msra.mxu0 0
    %303 = vmatprep.mubr.bf16.mxu0 0
    %304 = vmatmul.mubr.bf16.gmra.mrb[0].mxu0 %v269
    %v305 = vpop.f32.mrb[0].mxu0
    %v306 = vadd.f32 0.0, %v305
    %v307 = vpop.f32.mrb[0].mxu0
    %v308 = vpop.f32.mrb[0].mxu0
    %v309 = vpop.f32.mrb[0].mxu0
    %310 = vdwg.mxu0
    %v312 = vsel %vm267, %v264, 0
    %314 = vmatprep.subr.bf16.mxu0 0
    %315 = vmatpush1.bf16.msra.mxu0 %v92
    %316 = vmatprep.subr.bf16.mxu0 0
    %317 = vmatpush1.bf16.msra.mxu0 0
    %318 = vmatprep.subr.bf16.mxu0 0
    %319 = vmatpush1.bf16.msra.mxu0 0
    %320 = vmatprep.subr.bf16.mxu0 0
    %321 = vmatpush1.bf16.msra.mxu0 0
    %322 = vmatprep.subr.bf16.mxu0 0
    %323 = vmatpush1.bf16.msra.mxu0 0
    %324 = vmatprep.subr.bf16.mxu0 0
    %325 = vmatpush1.bf16.msra.mxu0 0
    %326 = vmatprep.subr.bf16.mxu0 0
    %327 = vmatpush1.bf16.msra.mxu0 0
    %328 = vmatprep.subr.bf16.mxu0 0
    %329 = vmatpush1.bf16.msra.mxu0 0
    %330 = vmatprep.subr.bf16.mxu0 0
    %331 = vmatpush1.bf16.msra.mxu0 0
    %332 = vmatprep.subr.bf16.mxu0 0
    %333 = vmatpush1.bf16.msra.mxu0 0
    %334 = vmatprep.subr.bf16.mxu0 0
    %335 = vmatpush1.bf16.msra.mxu0 0
    %336 = vmatprep.subr.bf16.mxu0 0
    %337 = vmatpush1.bf16.msra.mxu0 0
    %338 = vmatprep.subr.bf16.mxu0 0
    %339 = vmatpush1.bf16.msra.mxu0 0
    %340 = vmatprep.subr.bf16.mxu0 0
    %341 = vmatpush1.bf16.msra.mxu0 0
    %342 = vmatprep.subr.bf16.mxu0 0
    %343 = vmatpush1.bf16.msra.mxu0 0
    %344 = vmatprep.subr.bf16.mxu0 0
    %345 = vmatpush1.bf16.msra.mxu0 0
    %346 = vmatprep.mubr.bf16.mxu0 0
    %347 = vmatmul.mubr.bf16.gmra.mrb[0].mxu0 %v312
    %v348 = vpop.f32.mrb[0].mxu0
    %v349 = vadd.f32 0.0, %v348
    %v350 = vpop.f32.mrb[0].mxu0
    %v351 = vpop.f32.mrb[0].mxu0
    %v352 = vpop.f32.mrb[0].mxu0
    %353 = vdwg.mxu0
    %v355 = vsel %vm267, %v265, 0
    %357 = vmatprep.subr.bf16.mxu0 0
    %358 = vmatpush1.bf16.msra.mxu0 %v138
    %359 = vmatprep.subr.bf16.mxu0 0
    %360 = vmatpush1.bf16.msra.mxu0 0
    %361 = vmatprep.subr.bf16.mxu0 0
    %362 = vmatpush1.bf16.msra.mxu0 0
    %363 = vmatprep.subr.bf16.mxu0 0
    %364 = vmatpush1.bf16.msra.mxu0 0
    %365 = vmatprep.subr.bf16.mxu0 0
    %366 = vmatpush1.bf16.msra.mxu0 0
    %367 = vmatprep.subr.bf16.mxu0 0
    %368 = vmatpush1.bf16.msra.mxu0 0
    %369 = vmatprep.subr.bf16.mxu0 0
    %370 = vmatpush1.bf16.msra.mxu0 0
    %371 = vmatprep.subr.bf16.mxu0 0
    %372 = vmatpush1.bf16.msra.mxu0 0
    %373 = vmatprep.subr.bf16.mxu0 0
    %374 = vmatpush1.bf16.msra.mxu0 0
    %375 = vmatprep.subr.bf16.mxu0 0
    %376 = vmatpush1.bf16.msra.mxu0 0
    %377 = vmatprep.subr.bf16.mxu0 0
    %378 = vmatpush1.bf16.msra.mxu0 0
    %379 = vmatprep.subr.bf16.mxu0 0
    %380 = vmatpush1.bf16.msra.mxu0 0
    %381 = vmatprep.subr.bf16.mxu0 0
    %382 = vmatpush1.bf16.msra.mxu0 0
    %383 = vmatprep.subr.bf16.mxu0 0
    %384 = vmatpush1.bf16.msra.mxu0 0
    %385 = vmatprep.subr.bf16.mxu0 0
    %386 = vmatpush1.bf16.msra.mxu0 0
    %387 = vmatprep.subr.bf16.mxu0 0
    %388 = vmatpush1.bf16.msra.mxu0 0
    %389 = vmatprep.mubr.bf16.mxu0 0
    %390 = vmatmul.mubr.bf16.gmra.mrb[0].mxu0 %v355
    %v391 = vpop.f32.mrb[0].mxu0
    %v392 = vadd.f32 0.0, %v391
    %v393 = vpop.f32.mrb[0].mxu0
    %v394 = vpop.f32.mrb[0].mxu0
    %v395 = vpop.f32.mrb[0].mxu0
    %396 = vdwg.mxu0
    %v398 = vsel %vm267, %v266, 0
    %400 = vmatprep.subr.bf16.mxu0 0
    %401 = vmatpush1.bf16.msra.mxu0 %v184
    %402 = vmatprep.subr.bf16.mxu0 0
    %403 = vmatpush1.bf16.msra.mxu0 0
    %404 = vmatprep.subr.bf16.mxu0 0
    %405 = vmatpush1.bf16.msra.mxu0 0
    %406 = vmatprep.subr.bf16.mxu0 0
    %407 = vmatpush1.bf16.msra.mxu0 0
    %408 = vmatprep.subr.bf16.mxu0 0
    %409 = vmatpush1.bf16.msra.mxu0 0
    %410 = vmatprep.subr.bf16.mxu0 0
    %411 = vmatpush1.bf16.msra.mxu0 0
    %412 = vmatprep.subr.bf16.mxu0 0
    %413 = vmatpush1.bf16.msra.mxu0 0
    %414 = vmatprep.subr.bf16.mxu0 0
    %415 = vmatpush1.bf16.msra.mxu0 0
    %416 = vmatprep.subr.bf16.mxu0 0
    %417 = vmatpush1.bf16.msra.mxu0 0
    %418 = vmatprep.subr.bf16.mxu0 0
    %419 = vmatpush1.bf16.msra.mxu0 0
    %420 = vmatprep.subr.bf16.mxu0 0
    %421 = vmatpush1.bf16.msra.mxu0 0
    %422 = vmatprep.subr.bf16.mxu0 0
    %423 = vmatpush1.bf16.msra.mxu0 0
    %424 = vmatprep.subr.bf16.mxu0 0
    %425 = vmatpush1.bf16.msra.mxu0 0
    %426 = vmatprep.subr.bf16.mxu0 0
    %427 = vmatpush1.bf16.msra.mxu0 0
    %428 = vmatprep.subr.bf16.mxu0 0
    %429 = vmatpush1.bf16.msra.mxu0 0
    %430 = vmatprep.subr.bf16.mxu0 0
    %431 = vmatpush1.bf16.msra.mxu0 0
    %432 = vmatprep.mubr.bf16.mxu0 0
    %433 = vmatmul.mubr.bf16.gmra.mrb[0].mxu0 %v398
    %v434 = vpop.f32.mrb[0].mxu0
    %v435 = vadd.f32 0.0, %v434
    %v436 = vpop.f32.mrb[0].mxu0
    %v437 = vpop.f32.mrb[0].mxu0
    %v438 = vpop.f32.mrb[0].mxu0
    %439 = vdwg.mxu0
    %v440 = vrcp.pop %v253
    %v441 = vrcp.pop %v256
    %v442 = vrcp.pop %v259
    %v443 = vrcp.pop %v262
    %v444 = vlaneseq
    %v445 = vshrl.u32 %v444, 7
    %v446 = vsub.s32 0, %v445
    %v447 = vrot.slane %v440, %v446
    %v448 = vlaneseq
    %v449 = vshrl.u32 %v448, 7
    %v450 = vsub.s32 0, %v449
    %v451 = vrot.slane %v441, %v450
    %v452 = vlaneseq
    %v453 = vshrl.u32 %v452, 7
    %v454 = vsub.s32 0, %v453
    %v455 = vrot.slane %v442, %v454
    %v456 = vlaneseq
    %v457 = vshrl.u32 %v456, 7
    %v458 = vsub.s32 0, %v457
    %v459 = vrot.slane %v443, %v458
    %v460 = vmul.f32 %v306, %v447
    %v461 = vmul.f32 %v349, %v451
    %v462 = vmul.f32 %v392, %v455
    %v463 = vmul.f32 %v435, %v459
    %v464 = vmul.f32 %v460, 0.5
    %v465 = vmul.f32 %v461, 0.5
    %v466 = vmul.f32 %v462, 0.5
    %v467 = vmul.f32 %v463, 0.5
    %v468 = vmul.f32 %v460, 0.70710677
    %v469 = vmul.f32 %v461, 0.70710677
    %v470 = vmul.f32 %v462, 0.70710677
    %v471 = vmul.f32 %v463, 0.70710677
    %v472 = vand.u32 2147483647, %v468
    %v473 = vand.u32 2147483647, %v469
    %v474 = vand.u32 2147483647, %v470
    %v475 = vand.u32 2147483647, %v471
    %v476 = vmul.f32 %v472, 0.5
    %v477 = vmul.f32 %v473, 0.5
    %v478 = vmul.f32 %v474, 0.5
    %v479 = vmul.f32 %v475, 0.5
    %v480 = vadd.f32 %v476, 1.0
    %v481 = vadd.f32 %v477, 1.0
    %v482 = vadd.f32 %v478, 1.0
    %v483 = vadd.f32 %v479, 1.0
    %v484 = vrcp.pop %v480
    %v485 = vmul.f32 1.0, %v484
    %v486 = vrcp.pop %v481
    %v487 = vmul.f32 1.0, %v486
    %v488 = vrcp.pop %v482
    %v489 = vmul.f32 1.0, %v488
    %v490 = vrcp.pop %v483
    %v491 = vmul.f32 1.0, %v490
    %v492 = vmul.f32 %v485, 0.17087276
    %v493 = vmul.f32 %v487, 0.17087276
    %v494 = vmul.f32 %v489, 0.17087276
    %v495 = vmul.f32 %v491, 0.17087276
    %v496 = vadd.f32 %v492, -0.82215226
    %v497 = vadd.f32 %v493, -0.82215226
    %v498 = vadd.f32 %v494, -0.82215226
    %v499 = vadd.f32 %v495, -0.82215226
    %v500 = vmul.f32 %v485, %v496
    %v501 = vmul.f32 %v487, %v497
    %v502 = vmul.f32 %v489, %v498
    %v503 = vmul.f32 %v491, %v499
    %v504 = vadd.f32 %v500, 1.4885159
    %v505 = vadd.f32 %v501, 1.4885159
    %v506 = vadd.f32 %v502, 1.4885159
    %v507 = vadd.f32 %v503, 1.4885159
    %v508 = vmul.f32 %v485, %v504
    %v509 = vmul.f32 %v487, %v505
    %v510 = vmul.f32 %v489, %v506
    %v511 = vmul.f32 %v491, %v507
    %v512 = vadd.f32 %v508, -1.135204
    %v513 = vadd.f32 %v509, -1.135204
    %v514 = vadd.f32 %v510, -1.135204
    %v515 = vadd.f32 %v511, -1.135204
    %v516 = vmul.f32 %v485, %v512
    %v517 = vmul.f32 %v487, %v513
    %v518 = vmul.f32 %v489, %v514
    %v519 = vmul.f32 %v491, %v515
    %v520 = vadd.f32 %v516, 0.27886808
    %v521 = vadd.f32 %v517, 0.27886808
    %v522 = vadd.f32 %v518, 0.27886808
    %v523 = vadd.f32 %v519, 0.27886808
    %v524 = vmul.f32 %v485, %v520
    %v525 = vmul.f32 %v487, %v521
    %v526 = vmul.f32 %v489, %v522
    %v527 = vmul.f32 %v491, %v523
    %v528 = vadd.f32 %v524, -0.18628806
    %v529 = vadd.f32 %v525, -0.18628806
    %v530 = vadd.f32 %v526, -0.18628806
    %v531 = vadd.f32 %v527, -0.18628806
    %v532 = vmul.f32 %v485, %v528
    %v533 = vmul.f32 %v487, %v529
    %v534 = vmul.f32 %v489, %v530
    %v535 = vmul.f32 %v491, %v531
    %v536 = vadd.f32 %v532, 0.09678418
    %v537 = vadd.f32 %v533, 0.09678418
    %v538 = vadd.f32 %v534, 0.09678418
    %v539 = vadd.f32 %v535, 0.09678418
    %v540 = vmul.f32 %v485, %v536
    %v541 = vmul.f32 %v487, %v537
    %v542 = vmul.f32 %v489, %v538
    %v543 = vmul.f32 %v491, %v539
    %v544 = vadd.f32 %v540, 0.37409195
    %v545 = vadd.f32 %v541, 0.37409195
    %v546 = vadd.f32 %v542, 0.37409195
    %v547 = vadd.f32 %v543, 0.37409195
    %v548 = vmul.f32 %v485, %v544
    %v549 = vmul.f32 %v487, %v545
    %v550 = vmul.f32 %v489, %v546
    %v551 = vmul.f32 %v491, %v547
    %v552 = vadd.f32 %v548, 1.0000237
    %v553 = vadd.f32 %v549, 1.0000237
    %v554 = vadd.f32 %v550, 1.0000237
    %v555 = vadd.f32 %v551, 1.0000237
    %v556 = vmul.f32 %v485, %v552
    %v557 = vmul.f32 %v487, %v553
    %v558 = vmul.f32 %v489, %v554
    %v559 = vmul.f32 %v491, %v555
    %v560 = vadd.f32 %v556, -1.2655122
    %v561 = vadd.f32 %v557, -1.2655122
    %v562 = vadd.f32 %v558, -1.2655122
    %v563 = vadd.f32 %v559, -1.2655122
    %v564 = vsub.f32 0.0, %v472
    %v565 = vsub.f32 0.0, %v473
    %v566 = vsub.f32 0.0, %v474
    %v567 = vsub.f32 0.0, %v475
    %v568 = vmul.f32 %v564, %v472
    %v569 = vmul.f32 %v565, %v473
    %v570 = vmul.f32 %v566, %v474
    %v571 = vmul.f32 %v567, %v475
    %v572 = vadd.f32 %v568, %v560
    %v573 = vadd.f32 %v569, %v561
    %v574 = vadd.f32 %v570, %v562
    %v575 = vadd.f32 %v571, %v563
    %v576 = vmul.f32 %v572, 1.442695
    %v577 = vpow.pop %v576
    %v578 = vmul.f32 %v573, 1.442695
    %v579 = vpow.pop %v578
    %v580 = vmul.f32 %v574, 1.442695
    %v581 = vpow.pop %v580
    %v582 = vmul.f32 %v575, 1.442695
    %v583 = vpow.pop %v582
    %v584 = vmul.f32 %v485, %v577
    %v585 = vmul.f32 %v487, %v579
    %v586 = vmul.f32 %v489, %v581
    %v587 = vmul.f32 %v491, %v583
    %v588 = vsub.f32 1.0, %v584
    %v589 = vsub.f32 1.0, %v585
    %v590 = vsub.f32 1.0, %v586
    %v591 = vsub.f32 1.0, %v587
    %vm592 = vcmp.ge.f32.partialorder %v468, 0.0
    %vm593 = vcmp.ge.f32.partialorder %v469, 0.0
    %vm594 = vcmp.ge.f32.partialorder %v470, 0.0
    %vm595 = vcmp.ge.f32.partialorder %v471, 0.0
    %v596 = vsub.f32 0.0, %v588
    %v597 = vsub.f32 0.0, %v589
    %v598 = vsub.f32 0.0, %v590
    %v599 = vsub.f32 0.0, %v591
    %v600 = vsel %vm592, %v588, %v596
    %v601 = vsel %vm593, %v589, %v597
    %v602 = vsel %vm594, %v590, %v598
    %v603 = vsel %vm595, %v591, %v599
    %v604 = vadd.f32 %v600, 1.0
    %v605 = vadd.f32 %v601, 1.0
    %v606 = vadd.f32 %v602, 1.0
    %v607 = vadd.f32 %v603, 1.0
    %v608 = vmul.f32 %v464, %v604
    %v609 = vmul.f32 %v465, %v605
    %v610 = vmul.f32 %v466, %v606
    %v611 = vmul.f32 %v467, %v607
    %v612 = vld [vmem:[%s2] sm:$0x1]
    %v614 = vlaneseq
    %v615 = vshrl.u32 %v614, 7
    %v616 = vsub.s32 0, %v615
    %v617 = vrot.slane %v612, %v616
    %v619 = vmul.f32 %v608, %v617
    %v620 = vmul.f32 %v609, %v617
    %v621 = vmul.f32 %v610, %v617
    %v622 = vmul.f32 %v611, %v617
    %v623 = vld [vmem:[%s3] sm:$0x1]
    %v625 = vlaneseq
    %v626 = vshrl.u32 %v625, 7
    %v627 = vsub.s32 0, %v626
    %v628 = vrot.slane %v623, %v627
    %v630 = vadd.f32 %v619, %v628
    %v631 = vadd.f32 %v620, %v628
    %v632 = vadd.f32 %v621, %v628
    %v633 = vadd.f32 %v622, %v628
    %v638 = vrot.slane %v631, 7
    %vm639 = vcmask 1041409
    %v640 = vsel %vm639, %v638, %v630
    %v641 = vrot.slane %v632, 6
    %vm642 = vcmask 1042434
    %v643 = vsel %vm642, %v641, %v640
    %v644 = vrot.slane %v633, 5
    %vm645 = vcmask 1043459
    %v646 = vsel %vm645, %v644, %v643
    %648 = vst [vmem:[#allocation5] sm:$0xf] %v646
    // Predicated region
    $region22: #{tpu_custom_call.1} parent=1 // pred_check
      _
    $region23: #{tpu_custom_call.1} parent=1 // pred_check_branch
      %650 = sbr.rel (0) target = $region25
    $region24: #{tpu_custom_call.1} parent=1 // pred_region
      %s652 = ssub.s32 64, 64
      %653 = vsyncadd [#allocation4], %s652
      %s655 = sshll.u32 [#allocation5], 4
      %s656 = int_to_ptr.vmem [resolvable:$true] %s655
      %658 = dma.vmem_to_hbm [thread:$0]  %s656, 64, %s4, [#allocation4]
    $region25: #{tpu_custom_call.1} parent=1 // pred_fallthru
      _
    // Predicated region
    $region26: #{tpu_custom_call.1} parent=1 // pred_check
      _
    $region27: #{tpu_custom_call.1} parent=1 // pred_check_branch
      %660 = sbr.rel (0) target = $region29
    $region28: #{tpu_custom_call.1} parent=1 // pred_region
      %661 = dma.done [#allocation4], 64
    $region29: #{tpu_custom_call.1} parent=1 // pred_fallthru
      _
    %662 = vsyncpa [#allocation3], 1
    %663 = vsyncpa [#allocation4], 1

</llo_original>
